<compile_context>
chip_gen: v7x
topology: tpu7x:2x2x1
jax: 0.10.0
libtpu: 0.0.40
codegen_flags: <defaults>
</compile_context>

<pallas_src>
import math
from functools import partial

import jax
import jax.numpy as jnp
import numpy as np
from jax.experimental import pallas as pl
from jax.experimental.pallas import tpu as pltpu

_LANES = 128
_SUBLANES = 8
_TARGET_TILE_ROWS = 8192            # 8192 x 128 x 4 B = 4 MiB f32 per block
_VMEM_LIMIT_BYTES = 48 * 1024 * 1024
_NUM_CORES = 2                      # v7x megacore; serial (harmless) on v5e/v6e
_MIN_KERNEL_ELEMS = 1024            # below this a kernel launch is not worth it
                                    # (production could raise this to ~256K)


def _cdiv(a, b):
    return -(-a // b)


def _round_up(a, b):
    return _cdiv(a, b) * b


def _debug_stats_kernel(x_ref, sum_ref, sq_ref, *, rows, tile_rows, k_per_core):
    """Accumulate per-core (8, 128) f32 sum / sum-of-squares partials."""
    k = pl.program_id(1)                        # reduction axis (last)

    @pl.when(k == 0)                            # init keys on the reduction axis
    def _():
        sum_ref[...] = jnp.zeros_like(sum_ref)
        sq_ref[...] = jnp.zeros_like(sq_ref)

    xb = x_ref[...].astype(jnp.float32)         # (tile_rows, 128)

    g = pl.program_id(0) * k_per_core + k       # global block index
    start_row = g * tile_rows
    is_full = start_row + tile_rows <= rows

    def accumulate(vals):
        # (tile_rows, 128) -> (tile_rows//8, 8, 128): layout-preserving view,
        # reduction over the leading axis is pure full-vreg VPU adds.
        v3 = vals.reshape(-1, _SUBLANES, _LANES)
        sum_ref[...] += jnp.sum(v3, axis=0, keepdims=True)
        sq_ref[...] += jnp.sum(v3 * v3, axis=0, keepdims=True)

    @pl.when(is_full)
    def _():
        accumulate(xb)

    @pl.when(jnp.logical_not(is_full))
    def _():
        # Last (partial) block, or a fully out-of-range duplicate block from
        # the megacore remainder: zero rows past the end of the tensor
        # (out-of-bounds block rows contain unspecified data).
        row_ids = start_row + jax.lax.broadcasted_iota(
            jnp.int32, (tile_rows, _LANES), 0)
        accumulate(jnp.where(row_ids < rows, xb, 0.0))


@partial(jax.jit, static_argnames=("tile_rows",))
def _pallas_partial_sums(x, *, tile_rows=None):
    """Per-core (8,128) f32 lane partials of sum and sum-of-squares."""
    total = x.size                   # static under trace
    assert total % _LANES == 0
    rows = total // _LANES

    itemsize = jnp.dtype(x.dtype).itemsize
    sublane_align = max(_SUBLANES, 32 // itemsize)   # 8 f32 / 16 bf16 / 32 int8

    if tile_rows is None:
        tile_rows = _TARGET_TILE_ROWS
    tile_rows = min(_round_up(tile_rows, sublane_align),
                    _round_up(rows, sublane_align))

    n_blocks = _cdiv(rows, tile_rows)
    nc = _NUM_CORES if n_blocks >= _NUM_CORES else 1
    k_per_core = _cdiv(n_blocks, nc)

    x2d = x.reshape(rows, _LANES)    # free under jit: contiguous bitcast, no copy

    def in_index(c, k):
        g = c * k_per_core + k
        # Clamp duplicate trailing blocks (when nc does not divide n_blocks)
        # to the last real block; they are fully masked inside the kernel.
        return (jnp.minimum(g, n_blocks - 1), 0)

    acc_spec = pl.BlockSpec((1, _SUBLANES, _LANES), lambda c, k: (c, 0, 0))
    acc_shape = jax.ShapeDtypeStruct((nc, _SUBLANES, _LANES), jnp.float32)

    kernel = partial(_debug_stats_kernel, rows=rows, tile_rows=tile_rows,
                     k_per_core=k_per_core)

    return pl.pallas_call(
        kernel,
        out_shape=(acc_shape, acc_shape),
        grid=(nc, k_per_core),
        in_specs=[pl.BlockSpec((tile_rows, _LANES), in_index)],
        out_specs=(acc_spec, acc_spec),
        compiler_params=pltpu.CompilerParams(
            dimension_semantics=("parallel", "arbitrary"),
            vmem_limit_bytes=_VMEM_LIMIT_BYTES,
        ),
    )(x2d)


@jax.jit
def _jnp_partial_sums(x):
    """Fallback for tiny tensors and totals not divisible by 128."""
    xf = jnp.ravel(x).astype(jnp.float32)
    return jnp.sum(xf), jnp.sum(xf * xf)


def _finalize_stats(sum_part, sq_part, n_total):
    """Single host sync; tiny final reduce + mean/std math in f64 on host."""
    s_host, sq_host = jax.device_get((sum_part, sq_part))
    s = float(np.asarray(s_host, dtype=np.float64).sum())
    ss = float(np.asarray(sq_host, dtype=np.float64).sum())
    n = float(n_total)
    mean = s / n
    if n_total > 1:
        var = (ss - n * mean * mean) / (n - 1.0)
        std = math.sqrt(max(var, 0.0))
    else:
        std = float("nan")           # torch.std of a single element is NaN
    return mean, std


def _debug_stats(x, tile_rows=None):
    total = int(x.size)
    if total == 0:
        return float("nan"), float("nan")
    if total % _LANES != 0 or total < _MIN_KERNEL_ELEMS:
        # TODO(synk): totals not divisible by 128 cannot be reshaped to a
        # lane-dense 2-D slab without a pad/slice copy, so they use XLA's
        # native reduction instead of the Pallas kernel.
        s, ss = _jnp_partial_sums(x)
    else:
        s, ss = _pallas_partial_sums(x, tile_rows=tile_rows)
    return _finalize_stats(s, ss, total)


def debug_forward(x, is_t=False, text="", tile_rows=None):
    """Pallas equivalent of Debug.forward: prints mean/std, returns x."""
    del is_t                         # unused, matches the PyTorch signature
    mean, std = _debug_stats(x, tile_rows=tile_rows)
    print('%s %s %.6f %.6f' % (text, tuple(x.shape), mean, std))
    return x                         # identity pass-through: no device copy


if __name__ == "__main__":
    # 1) module-consistent small shape -> Pallas kernel path (single block)
    x = jax.random.normal(jax.random.PRNGKey(0), (2, 4, 16, 16), dtype=jnp.float32)
    y = debug_forward(x, is_t=False, text="debug")
    y = jax.block_until_ready(y)
    assert jnp.array_equal(y, x)                       # identity pass-through

    mean, std = _debug_stats(x)
    ref_mean = float(jnp.mean(x))
    ref_std = float(jnp.std(x, ddof=1))
    assert abs(mean - ref_mean) < 1e-4, (mean, ref_mean)
    assert abs(std - ref_std) < 1e-4, (std, ref_std)

    # 2) ragged total (1155 = 3*5*7*11, not a multiple of 128) -> jnp fallback
    x2 = 3.0 + 2.0 * jax.random.normal(
        jax.random.PRNGKey(1), (3, 5, 7, 11), dtype=jnp.float32)
    _ = debug_forward(x2, is_t=False, text="debug_ragged")
    mean2, std2 = _debug_stats(x2)
    assert abs(mean2 - float(jnp.mean(x2))) < 1e-4, mean2
    assert abs(std2 - float(jnp.std(x2, ddof=1))) < 1e-4, std2

    # 3) partial-block + megacore sharding: rows=1320 with tile_rows=512 gives
    #    3 blocks split over the 2-wide parallel axis (one block masked fully,
    #    one masked partially).
    x3 = 1.5 + 0.5 * jax.random.normal(
        jax.random.PRNGKey(2), (40, 33, 128), dtype=jnp.float32)
    _ = debug_forward(x3, is_t=False, text="debug_masked", tile_rows=512)
    mean3, std3 = _debug_stats(x3, tile_rows=512)
    assert abs(mean3 - float(jnp.mean(x3))) < 1e-4, mean3
    assert abs(std3 - float(jnp.std(x3, ddof=1))) < 1e-4, std3

    # 4) bf16 input exercises dtype-aware sublane alignment (16,128 native tile)
    x4 = jax.random.normal(jax.random.PRNGKey(3), (4, 16, 128), dtype=jnp.bfloat16)
    _ = debug_forward(x4, is_t=False, text="debug_bf16")
    mean4, std4 = _debug_stats(x4)
    x4f = x4.astype(jnp.float32)
    assert abs(mean4 - float(jnp.mean(x4f))) < 1e-3, mean4
    assert abs(std4 - float(jnp.std(x4f, ddof=1))) < 1e-3, std4

    print("KERNEL_OK")
</pallas_src>

<mosaic_0001>
module attributes {stable_mosaic.version = 11 : i64} {
  func.func @_debug_stats_kernel(%arg0: i32, %arg1: i32, %arg2: memref<16x128xf32, #tpu.memory_space<vmem>>, %arg3: memref<1x8x128xf32, #tpu.memory_space<vmem>>, %arg4: memref<1x8x128xf32, #tpu.memory_space<vmem>>) attributes {dimension_semantics = [#tpu.dimension_semantics<parallel>, #tpu.dimension_semantics<arbitrary>], iteration_bounds = array<i64: 1, 1>, scalar_prefetch = 0 : i64, scratch_operands = 0 : i64, tpu.core_type = #tpu.core_type<tc>, window_params = [{transform_indices = @transform_0, window_bounds = array<i64: 16, 128>}, {transform_indices = @transform_1, window_bounds = array<i64: 1, 8, 128>}, {transform_indices = @transform_2, window_bounds = array<i64: 1, 8, 128>}]} {
    %c0_i32 = arith.constant 0 : i32
    %0 = arith.cmpi eq, %arg1, %c0_i32 : i32
    %1 = arith.extui %0 : i1 to i32
    %c0_i32_0 = arith.constant 0 : i32
    %2 = arith.cmpi ne, %1, %c0_i32_0 : i32
    scf.if %2 {
      %cst = arith.constant 0.000000e+00 : f32
      %14 = vector.broadcast %cst : f32 to vector<1x8x128xf32>
      %c0_6 = arith.constant 0 : index
      %c0_7 = arith.constant 0 : index
      %c0_8 = arith.constant 0 : index
      %15 = vector.load %arg3[%c0_6, %c0_7, %c0_8] : memref<1x8x128xf32, #tpu.memory_space<vmem>>, vector<1x8x128xf32>
      tpu.vector_store %arg3[%c0_6, %c0_7, %c0_8], %14 {strides = array<i32>} : memref<1x8x128xf32, #tpu.memory_space<vmem>>, vector<1x8x128xf32>,
      %cst_9 = arith.constant 0.000000e+00 : f32
      %16 = vector.broadcast %cst_9 : f32 to vector<1x8x128xf32>
      %c0_10 = arith.constant 0 : index
      %c0_11 = arith.constant 0 : index
      %c0_12 = arith.constant 0 : index
      %17 = vector.load %arg4[%c0_10, %c0_11, %c0_12] : memref<1x8x128xf32, #tpu.memory_space<vmem>>, vector<1x8x128xf32>
      tpu.vector_store %arg4[%c0_10, %c0_11, %c0_12], %16 {strides = array<i32>} : memref<1x8x128xf32, #tpu.memory_space<vmem>>, vector<1x8x128xf32>,
    } else {
    }
    %c0 = arith.constant 0 : index
    %c0_1 = arith.constant 0 : index
    %3 = vector.load %arg2[%c0, %c0_1] : memref<16x128xf32, #tpu.memory_space<vmem>>, vector<16x128xf32>
    %c1_i32 = arith.constant 1 : i32
    %4 = arith.muli %arg0, %c1_i32 : i32
    %5 = arith.addi %4, %arg1 : i32
    %c16_i32 = arith.constant 16 : i32
    %6 = arith.muli %5, %c16_i32 : i32
    %c16_i32_2 = arith.constant 16 : i32
    %7 = arith.addi %6, %c16_i32_2 : i32
    %c16_i32_3 = arith.constant 16 : i32
    %8 = arith.cmpi sle, %7, %c16_i32_3 : i32
    %9 = arith.extui %8 : i1 to i32
    %c0_i32_4 = arith.constant 0 : i32
    %10 = arith.cmpi ne, %9, %c0_i32_4 : i32
    scf.if %10 {
      %14 = vector.shape_cast %3 : vector<16x128xf32> to vector<2x8x128xf32>
      %c0_6 = arith.constant 0 : index
      %c0_7 = arith.constant 0 : index
      %c0_8 = arith.constant 0 : index
      %15 = vector.load %arg3[%c0_6, %c0_7, %c0_8] : memref<1x8x128xf32, #tpu.memory_space<vmem>>, vector<1x8x128xf32>
      %cst = arith.constant dense<0.000000e+00> : vector<8x128xf32>
      %16 = vector.multi_reduction <add>, %14, %cst [0] : vector<2x8x128xf32> to vector<8x128xf32>
      %17 = vector.shape_cast %16 : vector<8x128xf32> to vector<1x8x128xf32>
      %18 = arith.addf %15, %17 : vector<1x8x128xf32>
      %c0_9 = arith.constant 0 : index
      %c0_10 = arith.constant 0 : index
      %c0_11 = arith.constant 0 : index
      %19 = vector.load %arg3[%c0_9, %c0_10, %c0_11] : memref<1x8x128xf32, #tpu.memory_space<vmem>>, vector<1x8x128xf32>
      tpu.vector_store %arg3[%c0_9, %c0_10, %c0_11], %18 {strides = array<i32>} : memref<1x8x128xf32, #tpu.memory_space<vmem>>, vector<1x8x128xf32>,
      %c0_12 = arith.constant 0 : index
      %c0_13 = arith.constant 0 : index
      %c0_14 = arith.constant 0 : index
      %20 = vector.load %arg4[%c0_12, %c0_13, %c0_14] : memref<1x8x128xf32, #tpu.memory_space<vmem>>, vector<1x8x128xf32>
      %21 = arith.mulf %14, %14 : vector<2x8x128xf32>
      %cst_15 = arith.constant dense<0.000000e+00> : vector<8x128xf32>
      %22 = vector.multi_reduction <add>, %21, %cst_15 [0] : vector<2x8x128xf32> to vector<8x128xf32>
      %23 = vector.shape_cast %22 : vector<8x128xf32> to vector<1x8x128xf32>
      %24 = arith.addf %20, %23 : vector<1x8x128xf32>
      %c0_16 = arith.constant 0 : index
      %c0_17 = arith.constant 0 : index
      %c0_18 = arith.constant 0 : index
      %25 = vector.load %arg4[%c0_16, %c0_17, %c0_18] : memref<1x8x128xf32, #tpu.memory_space<vmem>>, vector<1x8x128xf32>
      tpu.vector_store %arg4[%c0_16, %c0_17, %c0_18], %24 {strides = array<i32>} : memref<1x8x128xf32, #tpu.memory_space<vmem>>, vector<1x8x128xf32>,
    } else {
    }
    %true = arith.constant true
    %11 = arith.xori %8, %true : i1
    %12 = arith.extui %11 : i1 to i32
    %c0_i32_5 = arith.constant 0 : i32
    %13 = arith.cmpi ne, %12, %c0_i32_5 : i32
    scf.if %13 {
      %14 = tpu.iota {dimensions = array<i32: 0>} : vector<16x128xi32>
      %15 = vector.broadcast %6 : i32 to vector<16x128xi32>
      %16 = arith.addi %15, %14 : vector<16x128xi32>
      %c16_i32_6 = arith.constant 16 : i32
      %17 = vector.broadcast %c16_i32_6 : i32 to vector<16x128xi32>
      %18 = arith.cmpi slt, %16, %17 : vector<16x128xi32>
      %cst = arith.constant 0.000000e+00 : f32
      %19 = vector.broadcast %cst : f32 to vector<16x128xf32>
      %20 = arith.select %18, %3, %19 : vector<16x128xi1>, vector<16x128xf32>
      %21 = vector.shape_cast %20 : vector<16x128xf32> to vector<2x8x128xf32>
      %c0_7 = arith.constant 0 : index
      %c0_8 = arith.constant 0 : index
      %c0_9 = arith.constant 0 : index
      %22 = vector.load %arg3[%c0_7, %c0_8, %c0_9] : memref<1x8x128xf32, #tpu.memory_space<vmem>>, vector<1x8x128xf32>
      %cst_10 = arith.constant dense<0.000000e+00> : vector<8x128xf32>
      %23 = vector.multi_reduction <add>, %21, %cst_10 [0] : vector<2x8x128xf32> to vector<8x128xf32>
      %24 = vector.shape_cast %23 : vector<8x128xf32> to vector<1x8x128xf32>
      %25 = arith.addf %22, %24 : vector<1x8x128xf32>
      %c0_11 = arith.constant 0 : index
      %c0_12 = arith.constant 0 : index
      %c0_13 = arith.constant 0 : index
      %26 = vector.load %arg3[%c0_11, %c0_12, %c0_13] : memref<1x8x128xf32, #tpu.memory_space<vmem>>, vector<1x8x128xf32>
      tpu.vector_store %arg3[%c0_11, %c0_12, %c0_13], %25 {strides = array<i32>} : memref<1x8x128xf32, #tpu.memory_space<vmem>>, vector<1x8x128xf32>,
      %c0_14 = arith.constant 0 : index
      %c0_15 = arith.constant 0 : index
      %c0_16 = arith.constant 0 : index
      %27 = vector.load %arg4[%c0_14, %c0_15, %c0_16] : memref<1x8x128xf32, #tpu.memory_space<vmem>>, vector<1x8x128xf32>
      %28 = arith.mulf %21, %21 : vector<2x8x128xf32>
      %cst_17 = arith.constant dense<0.000000e+00> : vector<8x128xf32>
      %29 = vector.multi_reduction <add>, %28, %cst_17 [0] : vector<2x8x128xf32> to vector<8x128xf32>
      %30 = vector.shape_cast %29 : vector<8x128xf32> to vector<1x8x128xf32>
      %31 = arith.addf %27, %30 : vector<1x8x128xf32>
      %c0_18 = arith.constant 0 : index
      %c0_19 = arith.constant 0 : index
      %c0_20 = arith.constant 0 : index
      %32 = vector.load %arg4[%c0_18, %c0_19, %c0_20] : memref<1x8x128xf32, #tpu.memory_space<vmem>>, vector<1x8x128xf32>
      tpu.vector_store %arg4[%c0_18, %c0_19, %c0_20], %31 {strides = array<i32>} : memref<1x8x128xf32, #tpu.memory_space<vmem>>, vector<1x8x128xf32>,
    } else {
    }
    return
  }
  func.func @transform_0(%arg0: i32, %arg1: i32) -> (i32, i32) {
    %c1_i32 = arith.constant 1 : i32
    %0 = arith.muli %arg0, %c1_i32 : i32
    %1 = arith.addi %0, %arg1 : i32
    %c0_i32 = arith.constant 0 : i32
    %2 = arith.minsi %1, %c0_i32 : i32
    %c0_i32_0 = arith.constant 0 : i32
    %c0_i32_1 = arith.constant 0 : i32
    return %2, %c0_i32_0 : i32, i32
  }
  func.func @transform_1(%arg0: i32, %arg1: i32) -> (i32, i32, i32) {
    %c0_i32 = arith.constant 0 : i32
    %c0_i32_0 = arith.constant 0 : i32
    %c0_i32_1 = arith.constant 0 : i32
    return %arg0, %c0_i32, %c0_i32_0 : i32, i32, i32
  }
  func.func @transform_2(%arg0: i32, %arg1: i32) -> (i32, i32, i32) {
    %c0_i32 = arith.constant 0 : i32
    %c0_i32_0 = arith.constant 0 : i32
    %c0_i32_1 = arith.constant 0 : i32
    return %arg0, %c0_i32, %c0_i32_0 : i32, i32, i32
  }
}

</mosaic_0001>

<llo_original>
// kernel: _pallas_partial_sums.1
$region0: #{_pallas_partial_sums.1}
  #allocation0 [shape = 'u32[]', space=smem, size = 0x4, offset = 0x4, fixed_abs, tag = 'smem constant byte address 0x4 - core index']
  #allocation1 [shape = 'u32[144,128]{1,0:T(1,128)}', space=vmem, size = 0x12000, scoped, tag = 'internal scratch']
  %s0 = inlined_call_operand.vmem [shape: f32[16,128], index: 0, kind: input, shape index: {}]
  %s1 = inlined_call_operand.hbm [shape: f32[1,8,128], index: 1, kind: output, shape index: {0}]
  %s2 = inlined_call_operand.hbm [shape: f32[1,8,128], index: 2, kind: output, shape index: {1}]
  %3 = xla_tuple %s1, %s2
  %s4 = sld [smem:[#allocation0]]
  $region34: #{_pallas_partial_sums.1} parent=0
    _
  %s6 = ssub.s32 1, %s4
  %s7 = scalar_select 0, %s6, %s4
  $region1: #{_pallas_partial_sums.1} parent=0
    #allocation2 [shape = 'u8[4096]{0}', space=vmem, size = 0x1000, scoped, tag = 'output window, operand 0, single buffered']
    #allocation3 [shape = 's32[1]{0}', space=sflag, size = 0x4, scoped, tag = 'scoped memory for _pallas_partial_sums.1']
    #allocation4 [shape = 'u8[4096]{0}', space=vmem, size = 0x1000, scoped, tag = 'output window, operand 1, single buffered']
    #allocation5 [shape = 's32[1]{0}', space=sflag, size = 0x4, scoped, tag = 'scoped memory for _pallas_partial_sums.1']
    %8 = vsyncpa [#allocation3], 0
    %9 = vsyncpa [#allocation5], 0
    // Predicated region
    $region2: #{_pallas_partial_sums.1} parent=1 // pred_check
      _
    $region3: #{_pallas_partial_sums.1} parent=1 // pred_check_branch
      %11 = sbr.rel (0) target = $region5
    $region4: #{_pallas_partial_sums.1} parent=1 // pred_region
      %s12 = sadd.s32 0, 0
      %p13 = scmp.lt.s32.totalorder %s12, 0
      %s14 = scalar_select %p13, %s12, 0
      %s15 = smul.u32 2, %s14
      %p16 = scmp.lt.s32.totalorder %s15, 1
      %s17 = scalar_select %p16, %s15, 1
      %s18 = smul.addr %s17, 8
      %s19 = scalar_lea.vmem %s0, %s18
      %s20 = sadd.s32 0, 0
      %p21 = scmp.lt.s32.totalorder %s20, 0
      %s22 = scalar_select %p21, %s20, 0
      %s23 = smul.u32 2, %s22
    $region5: #{_pallas_partial_sums.1} parent=1 // pred_fallthru
      _
    %s24 = sadd.s32 0, 0
    %p25 = scmp.lt.s32.totalorder %s24, 0
    %s26 = scalar_select %p25, %s24, 0
    %s27 = smul.u32 2, %s26
    %p28 = scmp.lt.s32.totalorder %s27, 1
    %s29 = scalar_select %p28, %s27, 1
    %s30 = smul.addr %s29, 8
    %s31 = scalar_lea.vmem %s0, %s30
    %s32 = sadd.s32 0, 0
    %p33 = scmp.lt.s32.totalorder %s32, 0
    %s34 = scalar_select %p33, %s32, 0
    %s35 = smul.u32 2, %s34
    %p36 = scmp.lt.s32.totalorder %s35, 1
    %s37 = scalar_select %p36, %s35, 1
    %s38 = smul.addr %s37, 8
    %s39 = scalar_lea.vmem %s0, %s38
    %s40 = sadd.s32 0, 0
    %p41 = scmp.lt.s32.totalorder %s40, 0
    %s42 = scalar_select %p41, %s40, 0
    %s43 = smul.u32 2, %s42
    %p44 = scmp.eq.s32.totalorder 0, 0
    // Predicated region
    $region6: #{_pallas_partial_sums.1} parent=1 // pred_check
      %p45 = pneg %p44
    $region7: #{_pallas_partial_sums.1} parent=1 // pred_check_branch
      %47 = sbr.rel (%p45) target = $region9
    $region8: #{_pallas_partial_sums.1} parent=1 // pred_region
      %48 = vst [vmem:[#allocation2] sm:$0xff] 0.0
      %49 = vst [vmem:[#allocation4] sm:$0xff] 0.0
    $region9: #{_pallas_partial_sums.1} parent=1 // pred_fallthru
      _
    %v50 = vld [vmem:[%s39] sm:$0xff]
    %v51 = vld [vmem:[%s39 + $0x8] sm:$0xff]
    %s52 = sadd.s32 0, 0
    %s53 = smul.u32 %s52, 16
    %s54 = sadd.s32 %s53, 16
    %p55 = scmp.le.s32.totalorder %s54, 16
    // Predicated region
    $region10: #{_pallas_partial_sums.1} parent=1 // pred_check
      %p56 = pneg %p55
    $region11: #{_pallas_partial_sums.1} parent=1 // pred_check_branch
      %58 = sbr.rel (%p56) target = $region13
    $region12: #{_pallas_partial_sums.1} parent=1 // pred_region
      %v59 = vld [vmem:[#allocation2] sm:$0xff]
      %v60 = vadd.f32 %v50, %v51
      %v61 = vadd.f32 %v59, %v60
      %62 = vst [vmem:[#allocation2] sm:$0xff] %v61
      %v63 = vld [vmem:[#allocation4] sm:$0xff]
      %v64 = vmul.f32 %v50, %v50
      %v65 = vmul.f32 %v51, %v51
      %v66 = vadd.f32 %v64, %v65
      %v67 = vadd.f32 %v63, %v66
      %68 = vst [vmem:[#allocation4] sm:$0xff] %v67
    $region13: #{_pallas_partial_sums.1} parent=1 // pred_fallthru
      _
    %p69 = scmp.gt.s32.totalorder %s54, 16
    // Predicated region
    $region14: #{_pallas_partial_sums.1} parent=1 // pred_check
      %p70 = pneg %p69
    $region15: #{_pallas_partial_sums.1} parent=1 // pred_check_branch
      %72 = sbr.rel (%p70) target = $region17
    $region16: #{_pallas_partial_sums.1} parent=1 // pred_region
      %v73 = vlaneseq
      %v74 = vshrl.u32 %v73, 7
      %v75 = vadd.s32 %v74, 8
      %v76 = vstv %s53
      %v77 = vadd.s32 %v76, %v74
      %v78 = vadd.s32 %v76, %v75
      %vm79 = vcmp.lt.s32.totalorder %v77, 16
      %vm80 = vcmp.lt.s32.totalorder %v78, 16
      %v81 = vsel %vm79, %v50, 0.0
      %v82 = vsel %vm80, %v51, 0.0
      %v83 = vld [vmem:[#allocation2] sm:$0xff]
      %v84 = vadd.f32 %v81, %v82
      %v85 = vadd.f32 %v83, %v84
      %86 = vst [vmem:[#allocation2] sm:$0xff] %v85
      %v87 = vld [vmem:[#allocation4] sm:$0xff]
      %v88 = vmul.f32 %v81, %v81
      %v89 = vmul.f32 %v82, %v82
      %v90 = vadd.f32 %v88, %v89
      %v91 = vadd.f32 %v87, %v90
      %92 = vst [vmem:[#allocation4] sm:$0xff] %v91
    $region17: #{_pallas_partial_sums.1} parent=1 // pred_fallthru
      _
    // Predicated region
    $region18: #{_pallas_partial_sums.1} parent=1 // pred_check
      _
    $region19: #{_pallas_partial_sums.1} parent=1 // pred_check_branch
      %94 = sbr.rel (0) target = $region21
    $region20: #{_pallas_partial_sums.1} parent=1 // pred_region
      %s96 = ssub.s32 128, 128
      %97 = vsyncadd [#allocation3], %s96
      %s99 = sshll.u32 [#allocation2], 4
      %s100 = int_to_ptr.vmem [resolvable:$true] %s99
      %102 = dma.vmem_to_hbm [thread:$0]  %s100, 128, %s1, [#allocation3]
    $region21: #{_pallas_partial_sums.1} parent=1 // pred_fallthru
      _
    // Predicated region
    $region22: #{_pallas_partial_sums.1} parent=1 // pred_check
      _
    $region23: #{_pallas_partial_sums.1} parent=1 // pred_check_branch
      %104 = sbr.rel (0) target = $region25
    $region24: #{_pallas_partial_sums.1} parent=1 // pred_region
      %s106 = ssub.s32 128, 128
      %107 = vsyncadd [#allocation5], %s106
      %s109 = sshll.u32 [#allocation4], 4
      %s110 = int_to_ptr.vmem [resolvable:$true] %s109
      %112 = dma.vmem_to_hbm [thread:$0]  %s110, 128, %s2, [#allocation5]
    $region25: #{_pallas_partial_sums.1} parent=1 // pred_fallthru
      _
    // Predicated region
    $region26: #{_pallas_partial_sums.1} parent=1 // pred_check
      _
    $region27: #{_pallas_partial_sums.1} parent=1 // pred_check_branch
      %114 = sbr.rel (0) target = $region29
    $region28: #{_pallas_partial_sums.1} parent=1 // pred_region
      %115 = dma.done [#allocation3], 128
    $region29: #{_pallas_partial_sums.1} parent=1 // pred_fallthru
      _
    // Predicated region
    $region30: #{_pallas_partial_sums.1} parent=1 // pred_check
      _
    $region31: #{_pallas_partial_sums.1} parent=1 // pred_check_branch
      %117 = sbr.rel (0) target = $region33
    $region32: #{_pallas_partial_sums.1} parent=1 // pred_region
      %118 = dma.done [#allocation5], 128
    $region33: #{_pallas_partial_sums.1} parent=1 // pred_fallthru
      _
    %119 = vsyncpa [#allocation3], 1
    %120 = vsyncpa [#allocation5], 1

</llo_original>
